<compile_context>
chip_gen: v5e
topology: v5e:2x2
jax: 0.10.0
libtpu: 0.0.40
codegen_flags: <defaults>
</compile_context>

<pallas_src>
import functools

import jax
import jax.numpy as jnp
from jax import lax
from jax.experimental import pallas as pl
from jax.experimental.pallas import tpu as pltpu

SUBLANES = 8
LANES = 128

# 'mean' / 'sum' reduction path
SUM_COLS = 128
SUM_MAX_BLOCK_ROWS = 8192          # (8192,128) f32 = 4 MiB per input block
SUM_GRID_SPLIT = 2                 # shard reduction across up to 2 TensorCores

# 'none' (elementwise map) path -- lane-dense output
MAP_COL_CHOICES = (1024, 512, 256, 128)
MAP_MAX_BLOCK_ROWS = 512           # (512,1024) f32 = 2 MiB per block

PAD_LOGIT = -1.0e4                 # exp(-1e4)==0 in f32 -> focal term == 0 exactly
VMEM_LIMIT = 32 * 1024 * 1024


def _cdiv(a, b):
    return (a + b - 1) // b


def _sublane_align(dtype):
    """Minimum sublane multiple for a block of this dtype (packing-aware)."""
    return {1: 32, 2: 16, 4: 8}.get(jnp.dtype(dtype).itemsize, 8)


def _narrow(x):
    """Keep operands as narrow as possible; only widen unsupported dtypes."""
    dt = x.dtype
    if dt == jnp.bool_:
        return x.astype(jnp.int8)
    if jnp.dtype(dt).itemsize > 4:
        return x.astype(jnp.float32)
    return x


def _pow_gamma(x, gamma):
    """(1-pt)**gamma with small-integer-gamma unrolling (avoids EUP log+exp)."""
    g = float(gamma)
    gi = int(g)
    if float(gi) == g and 0 <= gi <= 4:
        if gi == 0:
            return jnp.ones_like(x)
        out = x
        for _ in range(gi - 1):
            out = out * x
        return out
    return x ** jnp.float32(g)


def _focal_elementwise(x, t, alpha, gamma):
    """Stable BCE-with-logits + focal modulation, computed in f32 in-kernel."""
    x = x.astype(jnp.float32)
    t = t.astype(jnp.float32)
    e = jnp.exp(-jnp.abs(x))                          # the only exp per element
    # binary_cross_entropy_with_logits (stable form):
    #   bce = max(x, 0) - x*t + log(1 + exp(-|x|))
    bce = jnp.maximum(x, 0.0) - x * t + jnp.log1p(e)
    # pt = exp(-bce) rewritten without a second exp (exact for binary targets):
    #   exp(-(max(x,0) - x*t)) == e when sign(x) disagrees with t, else 1
    mismatch = (x >= 0.0) != (t > 0.5)
    pt = jnp.where(mismatch, e, 1.0) / (1.0 + e)      # exact divide
    # alpha_t = alpha*t + (1-alpha)*(1-t), folded to 1 mul + 1 add
    alpha_t = (1.0 - alpha) + (2.0 * alpha - 1.0) * t
    return alpha_t * _pow_gamma(1.0 - pt, gamma) * bce


# --------------------------------------------------------------------------
# 'mean' / 'sum' path: resident (8,128) accumulator per TensorCore
# --------------------------------------------------------------------------
def _focal_sum_kernel(logits_ref, targets_ref, out_ref, *, alpha, gamma,
                      blocks_per_core, num_blocks, rows, block_rows, ragged):
    j = pl.program_id(1)

    @pl.when(j == 0)
    def _():
        out_ref[...] = jnp.zeros_like(out_ref)

    focal = _focal_elementwise(logits_ref[...], targets_ref[...], alpha, gamma)

    def _accum(x):
        # (block_rows,128) -> (block_rows//8, 8, 128); axis-0 sum is pure vreg
        # adds (no cross-lane movement). The (8,128) out block is the resident
        # accumulator across the 'arbitrary' j axis.
        out_ref[...] += jnp.sum(x.reshape(-1, SUBLANES, SUM_COLS), axis=0)

    if not ragged:
        _accum(focal)
    else:
        step = pl.program_id(0) * blocks_per_core + j

        @pl.when(step < num_blocks - 1)
        def _():
            _accum(focal)

        # Tail step: mask rows past the real array extent.  This also zeroes
        # the (clamped) megacore overhang step, whose step*block_rows >= rows.
        @pl.when(step >= num_blocks - 1)
        def _():
            row_ids = step * block_rows + lax.broadcasted_iota(
                jnp.int32, focal.shape, 0)
            _accum(jnp.where(row_ids < rows, focal, 0.0))


def _pad_to_slab(flat, total_elems, cols, pad_value):
    pad = total_elems - flat.shape[0]
    if pad:
        flat = jnp.pad(flat, (0, pad), constant_values=pad_value)
    return flat.reshape(-1, cols)


def _focal_sum(logits_flat, targets_flat, n, alpha, gamma):
    cols = SUM_COLS
    rows = _cdiv(n, cols)
    align = max(SUBLANES,
                _sublane_align(logits_flat.dtype),
                _sublane_align(targets_flat.dtype))

    # Only pad when unavoidable: non-lane-aligned n, or a tiny input whose row
    # count is below the block-tiling minimum.  Pad values contribute exactly
    # 0 to the focal sum, so they never need masking.
    rows_padded = max(rows, align)
    needs_pad = (n % cols != 0) or (rows_padded != rows)
    total = rows_padded * cols
    if needs_pad:
        logits2d = _pad_to_slab(logits_flat, total, cols, PAD_LOGIT)
        targets2d = _pad_to_slab(targets_flat, total, cols, 0)
    else:
        logits2d = logits_flat.reshape(rows_padded, cols)   # free reshape
        targets2d = targets_flat.reshape(rows_padded, cols)
    rows = rows_padded

    block_rows = min(SUM_MAX_BLOCK_ROWS, (rows // align) * align)
    blocks = _cdiv(rows, block_rows)
    split = SUM_GRID_SPLIT if blocks >= SUM_GRID_SPLIT else 1
    bpc = _cdiv(blocks, split)
    overhang = split * bpc != blocks
    ragged = (rows % block_rows != 0) or overhang

    if overhang:
        # Clamp the block index so the overhang step never addresses past the
        # array; its contribution is zeroed in-kernel via the row mask.
        def in_index(i, j):
            return (jnp.minimum(i * bpc + j, blocks - 1), 0)
    else:
        def in_index(i, j):
            return (i * bpc + j, 0)

    in_spec = pl.BlockSpec((block_rows, cols), in_index)
    out_spec = pl.BlockSpec((SUBLANES, cols), lambda i, j: (i, 0))

    kernel = functools.partial(
        _focal_sum_kernel, alpha=alpha, gamma=gamma,
        blocks_per_core=bpc, num_blocks=blocks, rows=rows,
        block_rows=block_rows, ragged=ragged)

    partials = pl.pallas_call(
        kernel,
        out_shape=jax.ShapeDtypeStruct((split * SUBLANES, cols), jnp.float32),
        grid_spec=pltpu.PrefetchScalarGridSpec(
            num_scalar_prefetch=0,
            grid=(split, bpc),
            in_specs=[in_spec, in_spec],
            out_specs=out_spec,
        ),
        compiler_params=pltpu.CompilerParams(
            dimension_semantics=("parallel", "arbitrary"),
            vmem_limit_bytes=VMEM_LIMIT,
        ),
    )(logits2d, targets2d)

    return jnp.sum(partials)   # tiny (split*8*128) final reduce in XLA


# --------------------------------------------------------------------------
# 'none' path: lane-dense elementwise map
# --------------------------------------------------------------------------
def _focal_map_kernel(logits_ref, targets_ref, out_ref, *, alpha, gamma):
    out_ref[...] = _focal_elementwise(
        logits_ref[...], targets_ref[...], alpha, gamma)


def _focal_map(logits_flat, targets_flat, n, out_shape, alpha, gamma):
    # Pick the largest lane-dense column count that divides n exactly, so the
    # kernel output has exactly n elements and the final reshape is free.
    cols = next((c for c in MAP_COL_CHOICES if n % c == 0), None)
    needs_pad = cols is None
    if needs_pad:
        cols = LANES
    rows = _cdiv(n, cols)

    align = max(SUBLANES,
                _sublane_align(logits_flat.dtype),
                _sublane_align(targets_flat.dtype))
    if rows < align:
        # Tiny input: widen operands (negligible cost) so the generic
        # 8-row-aligned / full-array blocking below is always legal.
        logits_flat = logits_flat.astype(jnp.float32)
        targets_flat = targets_flat.astype(jnp.float32)
        align = SUBLANES

    total = rows * cols
    if needs_pad:
        logits2d = _pad_to_slab(logits_flat, total, cols, PAD_LOGIT)
        targets2d = _pad_to_slab(targets_flat, total, cols, 0)
    else:
        logits2d = logits_flat.reshape(rows, cols)   # free reshape
        targets2d = targets_flat.reshape(rows, cols)

    if rows < SUBLANES:
        block_rows = rows                            # single full-array block
    else:
        block_rows = min(MAP_MAX_BLOCK_ROWS, (rows // align) * align)
    blocks = _cdiv(rows, block_rows)

    spec = pl.BlockSpec((block_rows, cols), lambda i: (i, 0))
    kernel = functools.partial(_focal_map_kernel, alpha=alpha, gamma=gamma)
    fmap = pl.pallas_call(
        kernel,
        out_shape=jax.ShapeDtypeStruct((rows, cols), jnp.float32),
        grid_spec=pltpu.PrefetchScalarGridSpec(
            num_scalar_prefetch=0,
            grid=(blocks,),
            in_specs=[spec, spec],
            out_specs=spec,
        ),
        compiler_params=pltpu.CompilerParams(
            dimension_semantics=("parallel",),
            vmem_limit_bytes=VMEM_LIMIT,
        ),
    )(logits2d, targets2d)

    if needs_pad:
        # Rare fallback (n not a multiple of 128) -> one output slice copy.
        return fmap.reshape(-1)[:n].reshape(out_shape)
    return fmap.reshape(out_shape)                   # free reshape


# --------------------------------------------------------------------------
# Public wrapper (FocalLoss.forward equivalent)
# --------------------------------------------------------------------------
def focal_loss(logits, targets, alpha=0.25, gamma=2.0, reduction="mean"):
    """JAX/Pallas equivalent of FocalLoss.forward.

    logits:  (B, 1, H, W) or (B, H, W), raw logits
    targets: (B, H, W), values in {0, 1} (bool / int / float)
    """
    if logits.ndim > targets.ndim:
        logits = jnp.squeeze(logits, axis=1)
    assert logits.shape == targets.shape

    out_shape = targets.shape
    n = 1
    for d in out_shape:
        n *= int(d)

    alpha = float(alpha)
    gamma = float(gamma)

    logits_flat = _narrow(logits).reshape(-1)
    targets_flat = _narrow(targets).reshape(-1)      # stays narrow (no f32 upcast)

    if reduction in ("mean", "sum"):
        total = _focal_sum(logits_flat, targets_flat, n, alpha, gamma)
        if reduction == "mean":
            return total / jnp.float32(n)
        return total
    return _focal_map(logits_flat, targets_flat, n, out_shape, alpha, gamma)


# --------------------------------------------------------------------------
# Pure-JAX reference (mirrors the PyTorch module)
# --------------------------------------------------------------------------
def _reference(logits, targets, alpha=0.25, gamma=2.0, reduction="mean"):
    if logits.ndim > targets.ndim:
        logits = jnp.squeeze(logits, axis=1)
    x = logits.astype(jnp.float32)
    t = targets.astype(jnp.float32)
    bce = jnp.maximum(x, 0.0) - x * t + jnp.log1p(jnp.exp(-jnp.abs(x)))
    pt = jnp.exp(-bce)
    alpha_t = alpha * t + (1.0 - alpha) * (1.0 - t)
    focal = alpha_t * (1.0 - pt) ** gamma * bce
    if reduction == "mean":
        return focal.mean()
    if reduction == "sum":
        return focal.sum()
    return focal


if __name__ == "__main__":
    key = jax.random.PRNGKey(0)
    k1, k2, k3, k4 = jax.random.split(key, 4)

    # Case 1: module-default usage, (B,1,H,W) logits + float targets.
    B, H, W = 2, 16, 16
    logits = jax.random.normal(k1, (B, 1, H, W), dtype=jnp.float32) * 2.0
    targets = (jax.random.uniform(k2, (B, H, W)) > 0.5).astype(jnp.float32)

    out = jax.block_until_ready(focal_loss(logits, targets, reduction="mean"))
    ref = _reference(logits, targets, reduction="mean")
    assert jnp.allclose(out, ref, rtol=1e-5, atol=1e-6), (out, ref)

    out_sum = jax.block_until_ready(focal_loss(logits, targets, reduction="sum"))
    ref_sum = _reference(logits, targets, reduction="sum")
    assert jnp.allclose(out_sum, ref_sum, rtol=1e-5, atol=1e-5), (out_sum, ref_sum)

    out_none = jax.block_until_ready(focal_loss(logits, targets, reduction="none"))
    ref_none = _reference(logits, targets, reduction="none")
    assert out_none.shape == (B, H, W)
    assert jnp.allclose(out_none, ref_none, rtol=1e-5, atol=1e-6)

    # Case 2: larger lane-aligned shape, bool targets (narrow-dtype path),
    # ragged final block + megacore split -> exercises the in-kernel tail mask.
    B2, H2, W2 = 2, 48, 96
    logits2 = jax.random.normal(k3, (B2, H2, W2), dtype=jnp.float32) * 3.0
    targets2 = jax.random.uniform(k4, (B2, H2, W2)) > 0.5   # bool
    out2 = jax.block_until_ready(focal_loss(logits2, targets2, reduction="mean"))
    ref2 = _reference(logits2, targets2, reduction="mean")
    assert jnp.allclose(out2, ref2, rtol=1e-5, atol=1e-6), (out2, ref2)

    # Case 3: element count not a multiple of 128 -> pad/slice fallback, 'none'.
    logits3 = jax.random.normal(k1, (1, 10, 13), dtype=jnp.float32)
    targets3 = (jax.random.uniform(k2, (1, 10, 13)) > 0.5).astype(jnp.float32)
    out3 = jax.block_until_ready(focal_loss(logits3, targets3, reduction="none"))
    ref3 = _reference(logits3, targets3, reduction="none")
    assert out3.shape == (1, 10, 13)
    assert jnp.allclose(out3, ref3, rtol=1e-5, atol=1e-6)

    # Case 4: non-integer gamma fallback (pow path).
    out_g = jax.block_until_ready(
        focal_loss(logits, targets, gamma=1.5, reduction="mean"))
    ref_g = _reference(logits, targets, gamma=1.5, reduction="mean")
    assert jnp.allclose(out_g, ref_g, rtol=1e-5, atol=1e-6), (out_g, ref_g)

    print("KERNEL_OK")
</pallas_src>

<mosaic_0001>
module attributes {stable_mosaic.version = 11 : i64} {
  func.func @_focal_sum_kernel(%arg0: i32, %arg1: i32, %arg2: memref<8x128xf32, #tpu.memory_space<vmem>>, %arg3: memref<8x128xf32, #tpu.memory_space<vmem>>, %arg4: memref<8x128xf32, #tpu.memory_space<vmem>>) attributes {dimension_semantics = [#tpu.dimension_semantics<parallel>, #tpu.dimension_semantics<arbitrary>], iteration_bounds = array<i64: 1, 1>, scalar_prefetch = 0 : i64, scratch_operands = 0 : i64, tpu.core_type = #tpu.core_type<tc>, window_params = [{transform_indices = @transform_0, window_bounds = array<i64: 8, 128>}, {transform_indices = @transform_1, window_bounds = array<i64: 8, 128>}, {transform_indices = @transform_2, window_bounds = array<i64: 8, 128>}]} {
    %c0_i32 = arith.constant 0 : i32
    %0 = arith.cmpi eq, %arg1, %c0_i32 : i32
    %1 = arith.extui %0 : i1 to i32
    %c0_i32_0 = arith.constant 0 : i32
    %2 = arith.cmpi ne, %1, %c0_i32_0 : i32
    scf.if %2 {
      %cst_17 = arith.constant 0.000000e+00 : f32
      %39 = vector.broadcast %cst_17 : f32 to vector<8x128xf32>
      %c0_18 = arith.constant 0 : index
      %c0_19 = arith.constant 0 : index
      %40 = vector.load %arg4[%c0_18, %c0_19] : memref<8x128xf32, #tpu.memory_space<vmem>>, vector<8x128xf32>
      tpu.vector_store %arg4[%c0_18, %c0_19], %39 {strides = array<i32>} : memref<8x128xf32, #tpu.memory_space<vmem>>, vector<8x128xf32>,
    } else {
    }
    %c0 = arith.constant 0 : index
    %c0_1 = arith.constant 0 : index
    %3 = vector.load %arg2[%c0, %c0_1] : memref<8x128xf32, #tpu.memory_space<vmem>>, vector<8x128xf32>
    %c0_2 = arith.constant 0 : index
    %c0_3 = arith.constant 0 : index
    %4 = vector.load %arg3[%c0_2, %c0_3] : memref<8x128xf32, #tpu.memory_space<vmem>>, vector<8x128xf32>
    %5 = math.absf %3 : vector<8x128xf32>
    %cst = arith.constant 0.000000e+00 : f32
    %6 = vector.broadcast %cst : f32 to vector<8x128xf32>
    %7 = arith.subf %6, %5 : vector<8x128xf32>
    %8 = math.exp %7 : vector<8x128xf32>
    %cst_4 = arith.constant 0.000000e+00 : f32
    %9 = vector.broadcast %cst_4 : f32 to vector<8x128xf32>
    %10 = arith.maximumf %3, %9 : vector<8x128xf32>
    %11 = arith.mulf %3, %4 : vector<8x128xf32>
    %12 = arith.subf %10, %11 : vector<8x128xf32>
    %13 = math.log1p %8 : vector<8x128xf32>
    %14 = arith.addf %12, %13 : vector<8x128xf32>
    %cst_5 = arith.constant 0.000000e+00 : f32
    %15 = vector.broadcast %cst_5 : f32 to vector<8x128xf32>
    %16 = arith.cmpf oge, %3, %15 : vector<8x128xf32>
    %cst_6 = arith.constant 5.000000e-01 : f32
    %17 = vector.broadcast %cst_6 : f32 to vector<8x128xf32>
    %18 = arith.cmpf ogt, %4, %17 : vector<8x128xf32>
    %19 = arith.xori %16, %18 : vector<8x128xi1>
    %cst_7 = arith.constant 1.000000e+00 : f32
    %20 = vector.broadcast %cst_7 : f32 to vector<8x128xf32>
    %21 = arith.select %19, %8, %20 : vector<8x128xi1>, vector<8x128xf32>
    %cst_8 = arith.constant 1.000000e+00 : f32
    %22 = vector.broadcast %cst_8 : f32 to vector<8x128xf32>
    %23 = arith.addf %22, %8 : vector<8x128xf32>
    %24 = arith.divf %21, %23 : vector<8x128xf32>
    %cst_9 = arith.constant -5.000000e-01 : f32
    %25 = vector.broadcast %cst_9 : f32 to vector<8x128xf32>
    %26 = arith.mulf %25, %4 : vector<8x128xf32>
    %cst_10 = arith.constant 7.500000e-01 : f32
    %27 = vector.broadcast %cst_10 : f32 to vector<8x128xf32>
    %28 = arith.addf %27, %26 : vector<8x128xf32>
    %cst_11 = arith.constant 1.000000e+00 : f32
    %29 = vector.broadcast %cst_11 : f32 to vector<8x128xf32>
    %30 = arith.subf %29, %24 : vector<8x128xf32>
    %31 = arith.mulf %30, %30 : vector<8x128xf32>
    %32 = arith.mulf %28, %31 : vector<8x128xf32>
    %33 = arith.mulf %32, %14 : vector<8x128xf32>
    %c0_12 = arith.constant 0 : index
    %c0_13 = arith.constant 0 : index
    %34 = vector.load %arg4[%c0_12, %c0_13] : memref<8x128xf32, #tpu.memory_space<vmem>>, vector<8x128xf32>
    %35 = vector.shape_cast %33 : vector<8x128xf32> to vector<1x8x128xf32>
    %cst_14 = arith.constant dense<0.000000e+00> : vector<8x128xf32>
    %36 = vector.multi_reduction <add>, %35, %cst_14 [0] : vector<1x8x128xf32> to vector<8x128xf32>
    %37 = arith.addf %34, %36 : vector<8x128xf32>
    %c0_15 = arith.constant 0 : index
    %c0_16 = arith.constant 0 : index
    %38 = vector.load %arg4[%c0_15, %c0_16] : memref<8x128xf32, #tpu.memory_space<vmem>>, vector<8x128xf32>
    tpu.vector_store %arg4[%c0_15, %c0_16], %37 {strides = array<i32>} : memref<8x128xf32, #tpu.memory_space<vmem>>, vector<8x128xf32>,
    return
  }
  func.func @transform_0(%arg0: i32, %arg1: i32) -> (i32, i32) {
    %c1_i32 = arith.constant 1 : i32
    %0 = arith.muli %arg0, %c1_i32 : i32
    %1 = arith.addi %0, %arg1 : i32
    %c0_i32 = arith.constant 0 : i32
    %c0_i32_0 = arith.constant 0 : i32
    return %1, %c0_i32 : i32, i32
  }
  func.func @transform_1(%arg0: i32, %arg1: i32) -> (i32, i32) {
    %c1_i32 = arith.constant 1 : i32
    %0 = arith.muli %arg0, %c1_i32 : i32
    %1 = arith.addi %0, %arg1 : i32
    %c0_i32 = arith.constant 0 : i32
    %c0_i32_0 = arith.constant 0 : i32
    return %1, %c0_i32 : i32, i32
  }
  func.func @transform_2(%arg0: i32, %arg1: i32) -> (i32, i32) {
    %c0_i32 = arith.constant 0 : i32
    %c0_i32_0 = arith.constant 0 : i32
    return %arg0, %c0_i32 : i32, i32
  }
}

</mosaic_0001>

<llo_original>
// kernel: tpu_custom_call.1
$region0: #{tpu_custom_call.1}
  #allocation0 [shape = 'u32[]', space=smem, size = 0x4, offset = 0x4, fixed_abs, tag = 'smem constant byte address 0x4 - core index']
  #allocation1 [shape = 'u32[72,128]{1,0:T(1,128)}', space=vmem, size = 0x9000, scoped, tag = 'internal scratch']
  %s0 = inlined_call_operand.hbm [shape: f32[8,128], index: 0, kind: input, shape index: {}]
  %s1 = inlined_call_operand.hbm [shape: f32[8,128], index: 1, kind: input, shape index: {}]
  %s2 = inlined_call_operand.hbm [shape: f32[8,128], index: 2, kind: output, shape index: {}]
  %s3 = sld [smem:[#allocation0]]
  $region30: #{tpu_custom_call.1} parent=0
    _
  %s5 = ssub.s32 1, %s3
  %s6 = scalar_select 0, %s5, %s3
  $region1: #{tpu_custom_call.1} parent=0
    #allocation2 [shape = 'u8[4096]{0}', space=vmem, size = 0x1000, scoped, tag = 'input window, operand 0, single buffered']
    #allocation3 [shape = 's32[1]{0}', space=sflag, size = 0x4, scoped, tag = 'scoped memory for tpu_custom_call.1']
    #allocation4 [shape = 's32[1]{0}', space=sflag, size = 0x4, scoped, tag = 'scoped memory for tpu_custom_call.1']
    #allocation5 [shape = 'u8[4096]{0}', space=vmem, size = 0x1000, scoped, tag = 'input window, operand 1, single buffered']
    #allocation6 [shape = 's32[1]{0}', space=sflag, size = 0x4, scoped, tag = 'scoped memory for tpu_custom_call.1']
    #allocation7 [shape = 'u8[4096]{0}', space=vmem, size = 0x1000, scoped, tag = 'output window, operand 0, single buffered']
    %7 = vsyncpa [#allocation3], 0
    %8 = vsyncpa [#allocation6], 0
    %9 = vsyncpa [#allocation4], 0
    // Predicated region
    $region2: #{tpu_custom_call.1} parent=1 // pred_check
      _
    $region3: #{tpu_custom_call.1} parent=1 // pred_check_branch
      %11 = sbr.rel (0) target = $region5
    $region4: #{tpu_custom_call.1} parent=1 // pred_region
      %s12 = sadd.s32 0, 0
      %14 = vsyncadd [#allocation3], 0
      %s15 = smul.addr %s12, 8
      %s16 = scalar_lea.hbm %s0, %s15
      %s18 = sshll.u32 %s16, 4
      %s19 = int_to_ptr.hbm [resolvable:$true] %s18
      %s20 = sshll.u32 [#allocation2], 4
      %s21 = int_to_ptr.vmem [resolvable:$true] %s20
      %23 = dma.hbm_to_vmem [thread:$0]  %s19, 128, %s21, [#allocation3]
    $region5: #{tpu_custom_call.1} parent=1 // pred_fallthru
      _
    // Predicated region
    $region6: #{tpu_custom_call.1} parent=1 // pred_check
      _
    $region7: #{tpu_custom_call.1} parent=1 // pred_check_branch
      %25 = sbr.rel (0) target = $region9
    $region8: #{tpu_custom_call.1} parent=1 // pred_region
      %s26 = sadd.s32 0, 0
      %28 = vsyncadd [#allocation6], 0
      %s29 = smul.addr %s26, 8
      %s30 = scalar_lea.hbm %s1, %s29
      %s32 = sshll.u32 %s30, 4
      %s33 = int_to_ptr.hbm [resolvable:$true] %s32
      %s34 = sshll.u32 [#allocation5], 4
      %s35 = int_to_ptr.vmem [resolvable:$true] %s34
      %37 = dma.hbm_to_vmem [thread:$0]  %s33, 128, %s35, [#allocation6]
    $region9: #{tpu_custom_call.1} parent=1 // pred_fallthru
      _
    // Predicated region
    $region10: #{tpu_custom_call.1} parent=1 // pred_check
      _
    $region11: #{tpu_custom_call.1} parent=1 // pred_check_branch
      %39 = sbr.rel (0) target = $region13
    $region12: #{tpu_custom_call.1} parent=1 // pred_region
      %41 = dma.done [#allocation3], 128
    $region13: #{tpu_custom_call.1} parent=1 // pred_fallthru
      _
    // Predicated region
    $region14: #{tpu_custom_call.1} parent=1 // pred_check
      _
    $region15: #{tpu_custom_call.1} parent=1 // pred_check_branch
      %43 = sbr.rel (0) target = $region17
    $region16: #{tpu_custom_call.1} parent=1 // pred_region
      %45 = dma.done [#allocation6], 128
    $region17: #{tpu_custom_call.1} parent=1 // pred_fallthru
      _
    %s46 = sadd.s32 0, 0
    %s47 = sadd.s32 0, 0
    %p48 = scmp.eq.s32.totalorder 0, 0
    // Predicated region
    $region18: #{tpu_custom_call.1} parent=1 // pred_check
      %p49 = pneg %p48
    $region19: #{tpu_custom_call.1} parent=1 // pred_check_branch
      %51 = sbr.rel (%p49) target = $region21
    $region20: #{tpu_custom_call.1} parent=1 // pred_region
      %52 = vst [vmem:[#allocation7] sm:$0xff] 0.0
    $region21: #{tpu_custom_call.1} parent=1 // pred_fallthru
      _
    %v53 = vld [vmem:[#allocation2] sm:$0xff]
    %v54 = vld [vmem:[#allocation5] sm:$0xff]
    %v55 = vand.u32 2147483647, %v53
    %v56 = vsub.f32 0.0, %v55
    %v57 = vmul.f32 %v56, 1.442695
    %v58 = vpow.pop %v57
    %v59 = vmax.f32 %v53, 0.0
    %v60 = vmul.f32 %v53, %v54
    %v61 = vsub.f32 %v59, %v60
    %v62 = vadd.f32 %v58, 1.0
    %v63 = vlog2.pop %v62
    %v64 = vmul.f32 %v63, 0.6931472
    %v65 = vmul.f32 -0.5, %v58
    %v66 = vadd.f32 %v65, 1.0
    %v67 = vmul.f32 %v66, %v58
    %v68 = vand.u32 2147483647, %v58
    %vm69 = vcmp.lt.f32.partialorder %v68, 0.0004427343
    %v70 = vsel %vm69, %v67, %v64
    %v71 = vadd.f32 %v61, %v70
    %vm72 = vcmp.ge.f32.partialorder %v53, 0.0
    %vm73 = vcmp.gt.f32.partialorder %v54, 0.5
    %vm74 = vmxor %vm72, %vm73
    %v75 = vsel %vm74, %v58, 1.0
    %v76 = vadd.f32 %v58, 1.0
    %v77 = vrcp.pop %v76
    %v78 = vmul.f32 %v76, %v77
    %v79 = vsub.f32 1.0, %v78
    %v80 = vmul.f32 %v77, %v79
    %v81 = vadd.f32 %v77, %v80
    %vm82 = vweird.f32 %v76
    %vm83 = vweird.f32 %v77
    %vm84 = vmor %vm82, %vm83
    %v85 = vsel %vm84, %v77, %v81
    %v86 = vand.u32 2147483647, %v76
    %vm87 = vcmp.eq.f32.partialorder %v86, 8.507059e+37
    %v88 = vand.u32 %v76, 2147483648
    %v89 = vor.u32 1.1754944e-38, %v88
    %v90 = vsel %vm87, %v89, %v85
    %v91 = vmul.f32 %v75, %v90
    %v92 = vmul.f32 %v54, -0.5
    %v93 = vadd.f32 %v92, 0.75
    %v94 = vsub.f32 1.0, %v91
    %v95 = vmul.f32 %v94, %v94
    %v96 = vmul.f32 %v93, %v95
    %v97 = vmul.f32 %v96, %v71
    %v98 = vld [vmem:[#allocation7] sm:$0xff]
    %v99 = vadd.f32 %v97, 0.0
    %v100 = vadd.f32 %v98, %v99
    %101 = vst [vmem:[#allocation7] sm:$0xff] %v100
    // Predicated region
    $region22: #{tpu_custom_call.1} parent=1 // pred_check
      _
    $region23: #{tpu_custom_call.1} parent=1 // pred_check_branch
      %103 = sbr.rel (0) target = $region25
    $region24: #{tpu_custom_call.1} parent=1 // pred_region
      %105 = vsyncadd [#allocation4], 0
      %s107 = sshll.u32 [#allocation7], 4
      %s108 = int_to_ptr.vmem [resolvable:$true] %s107
      %s109 = sshll.u32 %s2, 4
      %s110 = int_to_ptr.hbm [resolvable:$true] %s109
      %112 = dma.vmem_to_hbm [thread:$0]  %s108, 128, %s110, [#allocation4]
    $region25: #{tpu_custom_call.1} parent=1 // pred_fallthru
      _
    // Predicated region
    $region26: #{tpu_custom_call.1} parent=1 // pred_check
      _
    $region27: #{tpu_custom_call.1} parent=1 // pred_check_branch
      %114 = sbr.rel (0) target = $region29
    $region28: #{tpu_custom_call.1} parent=1 // pred_region
      %116 = dma.done [#allocation4], 128
    $region29: #{tpu_custom_call.1} parent=1 // pred_fallthru
      _
    %117 = vsyncpa [#allocation3], 1
    %118 = vsyncpa [#allocation6], 1
    %119 = vsyncpa [#allocation4], 1

</llo_original>
